<compile_context>
chip_gen: v7x
topology: tpu7x:2x2x1
jax: 0.10.0
libtpu: 0.0.40
codegen_flags: <defaults>
</compile_context>

<pallas_src>
import math
import jax
import jax.numpy as jnp
from jax.experimental import pallas as pl
from jax.experimental.pallas import tpu as pltpu

INPUT_SIZE = 784
HIDDEN_SIZE = 256
NUM_CLASSES = 5
LANE = 128       # fc2 output padded to a multiple of the TPU lane width
TB_MAX = 1024    # max batch tile: ~8 MiB working set, fits all scoped-VMEM defaults


def _round_up(n, m):
    return (n + m - 1) // m * m


def _cdiv(a, b):
    return -(-a // b)


def _choose_tb(B):
    """Batch tile size.

    * B <= 16          : single block equal to the full batch dim (valid block shape)
    * 16 < B <= TB_MAX : split into >= 2 grid steps so v7x megacore shards both TCs
    * B  > TB_MAX      : fixed TB_MAX tiles
    """
    if B <= 16:
        return B
    if B <= TB_MAX:
        return _round_up(_cdiv(B, 2), 8)
    return TB_MAX


def mlp_kernel(x_ref, w1_ref, b1_ref, w2_ref, b2_ref, o_ref):
    # In-kernel f32 -> bf16 cast of x (VPU; free filler under the DMA bottleneck).
    x_bf = x_ref[...].astype(jnp.bfloat16)
    # fc1: (TB, 784)bf16 @ (784, 256)bf16 -> f32 accumulator on the MXU
    h = jnp.dot(x_bf, w1_ref[...], preferred_element_type=jnp.float32)
    h = h + b1_ref[...]            # bias add in f32 (VPU)
    h = jnp.maximum(h, 0.0)        # ReLU in f32 (VPU)
    # fc2: (TB, 256)bf16 @ (256, 128)bf16 -> f32; lane-dense 128-wide output
    out = jnp.dot(h.astype(jnp.bfloat16), w2_ref[...],
                  preferred_element_type=jnp.float32)
    out = out + b2_ref[...]
    o_ref[...] = out.astype(o_ref.dtype)   # bf16 store (half the writeback)


def prepare_params(w1, b1, w2, b2):
    """One-time weight prep (hoisted out of the per-call path).

    w1: (784, H); b1: (H,); w2: (H, C); b2: (C,).  Returns device-resident,
    kernel-ready arrays: bf16 w1, (1,H) f32 b1, bf16 w2 zero-padded to 128 cols,
    (1,128) f32 padded b2.
    """
    hidden = w1.shape[1]
    num_classes = w2.shape[1]
    n_pad = _round_up(num_classes, LANE)
    w1_bf = w1.astype(jnp.bfloat16)
    b1_2d = b1.reshape(1, hidden).astype(jnp.float32)
    w2_p = jnp.zeros((hidden, n_pad), jnp.bfloat16).at[:, :num_classes].set(
        w2.astype(jnp.bfloat16))
    b2_p = jnp.zeros((1, n_pad), jnp.float32).at[:, :num_classes].set(
        b2.astype(jnp.float32))
    return {"w1": w1_bf, "b1": b1_2d, "w2": w2_p, "b2": b2_p,
            "num_classes": num_classes}


def incremental_model_forward(x, params):
    """x: (B, C, H, W) or (B, 784) float32; params from prepare_params().

    Returns f32 logits of shape (B, num_classes), matching the PyTorch forward.
    """
    w1_bf, b1_2d = params["w1"], params["b1"]
    w2_p, b2_p = params["w2"], params["b2"]
    num_classes = params["num_classes"]
    in_features, hidden = w1_bf.shape
    n_pad = w2_p.shape[1]

    B = x.shape[0]
    x2d = x.reshape(B, -1)                 # x.view(B, -1); no copy, no cast
    assert x2d.shape[1] == in_features

    tb = _choose_tb(B)
    num_blocks = _cdiv(B, tb)
    grid = (num_blocks,)

    flops = 2 * B * in_features * hidden + 2 * B * hidden * n_pad
    bytes_accessed = (x2d.size * x2d.dtype.itemsize
                      + w1_bf.size * 2 + w2_p.size * 2
                      + b1_2d.size * 4 + b2_p.size * 4
                      + B * n_pad * 2)

    out = pl.pallas_call(
        mlp_kernel,
        out_shape=jax.ShapeDtypeStruct((B, n_pad), jnp.bfloat16),
        grid_spec=pltpu.PrefetchScalarGridSpec(
            num_scalar_prefetch=0,
            grid=grid,
            in_specs=[
                pl.BlockSpec((tb, in_features), lambda i: (i, 0)),      # x tile
                pl.BlockSpec((in_features, hidden), lambda i: (0, 0)),  # w1 resident
                pl.BlockSpec((1, hidden), lambda i: (0, 0)),            # b1 resident
                pl.BlockSpec((hidden, n_pad), lambda i: (0, 0)),        # w2 resident
                pl.BlockSpec((1, n_pad), lambda i: (0, 0)),             # b2 resident
            ],
            out_specs=pl.BlockSpec((tb, n_pad), lambda i: (i, 0)),
        ),
        compiler_params=pltpu.CompilerParams(
            dimension_semantics=("parallel",),
        ),
        cost_estimate=pl.CostEstimate(
            flops=flops, transcendentals=0, bytes_accessed=bytes_accessed),
    )(x2d, w1_bf, b1_2d, w2_p, b2_p)

    # Strip lane padding on the class dimension and upcast the tiny slice to f32.
    return out[:, :num_classes].astype(jnp.float32)


def init_params(key, input_size=INPUT_SIZE, hidden_size=HIDDEN_SIZE,
                num_classes=NUM_CLASSES):
    """Deterministic init mimicking PyTorch nn.Linear defaults
    (uniform(-1/sqrt(fan_in), 1/sqrt(fan_in)) for weight and bias)."""
    k1, k2, k3, k4 = jax.random.split(key, 4)
    bound1 = 1.0 / math.sqrt(input_size)
    bound2 = 1.0 / math.sqrt(hidden_size)
    # stored as (in_features, out_features)
    w1 = jax.random.uniform(k1, (input_size, hidden_size), jnp.float32,
                            -bound1, bound1)
    b1 = jax.random.uniform(k2, (hidden_size,), jnp.float32, -bound1, bound1)
    w2 = jax.random.uniform(k3, (hidden_size, num_classes), jnp.float32,
                            -bound2, bound2)
    b2 = jax.random.uniform(k4, (num_classes,), jnp.float32, -bound2, bound2)
    return w1, b1, w2, b2


if __name__ == "__main__":
    key = jax.random.PRNGKey(0)
    kx1, kx2, kp = jax.random.split(key, 3)

    w1, b1, w2, b2 = init_params(kp)
    params = prepare_params(w1, b1, w2, b2)   # one-time weight prep (hoisted)

    def ref_f32(x):
        x2d = x.reshape(x.shape[0], -1)
        return jnp.maximum(x2d @ w1 + b1, 0.0) @ w2 + b2

    def ref_bf16(x):  # matches kernel's bf16-operand / f32-accumulate semantics
        x2d = x.reshape(x.shape[0], -1)
        h = jnp.dot(x2d.astype(jnp.bfloat16), w1.astype(jnp.bfloat16),
                    preferred_element_type=jnp.float32) + b1
        h = jnp.maximum(h, 0.0)
        return jnp.dot(h.astype(jnp.bfloat16), w2.astype(jnp.bfloat16),
                       preferred_element_type=jnp.float32) + b2

    # Case 1: tiny batch -> single block, grid=(1,)
    x_small = jax.random.normal(kx1, (4, 1, 28, 28), dtype=jnp.float32)
    logits = incremental_model_forward(x_small, params)
    jax.block_until_ready(logits)
    assert logits.shape == (4, NUM_CLASSES)
    assert logits.dtype == jnp.float32
    assert jnp.allclose(logits, ref_bf16(x_small), atol=5e-3, rtol=1e-2)
    assert jnp.allclose(logits, ref_f32(x_small), atol=5e-2, rtol=5e-2)

    # Case 2: mid batch -> 2 grid steps (v7x megacore split) + ragged masked tail
    x_mid = jax.random.normal(kx2, (20, 1, 28, 28), dtype=jnp.float32)
    logits_mid = incremental_model_forward(x_mid, params)
    jax.block_until_ready(logits_mid)
    assert logits_mid.shape == (20, NUM_CLASSES)
    assert jnp.allclose(logits_mid, ref_bf16(x_mid), atol=5e-3, rtol=1e-2)
    assert jnp.allclose(logits_mid, ref_f32(x_mid), atol=5e-2, rtol=5e-2)

    print("KERNEL_OK")
</pallas_src>

<mosaic_0001>
module attributes {stable_mosaic.version = 11 : i64} {
  func.func @mlp_kernel(%arg0: i32, %arg1: memref<4x784xf32, #tpu.memory_space<vmem>>, %arg2: memref<784x256xbf16, #tpu.memory_space<vmem>>, %arg3: memref<1x256xf32, #tpu.memory_space<vmem>>, %arg4: memref<256x128xbf16, #tpu.memory_space<vmem>>, %arg5: memref<1x128xf32, #tpu.memory_space<vmem>>, %arg6: memref<4x128xbf16, #tpu.memory_space<vmem>>) attributes {dimension_semantics = [#tpu.dimension_semantics<parallel>], iteration_bounds = array<i64: 1>, scalar_prefetch = 0 : i64, scratch_operands = 0 : i64, tpu.core_type = #tpu.core_type<tc>, window_params = [{transform_indices = @transform_0, window_bounds = array<i64: 4, 784>}, {pipeline_mode = #tpu.pipeline_mode<synchronous>, transform_indices = @transform_1, window_bounds = array<i64: 784, 256>}, {pipeline_mode = #tpu.pipeline_mode<synchronous>, transform_indices = @transform_2, window_bounds = array<i64: 1, 256>}, {pipeline_mode = #tpu.pipeline_mode<synchronous>, transform_indices = @transform_3, window_bounds = array<i64: 256, 128>}, {pipeline_mode = #tpu.pipeline_mode<synchronous>, transform_indices = @transform_4, window_bounds = array<i64: 1, 128>}, {transform_indices = @transform_5, window_bounds = array<i64: 4, 128>}]} {
    %c0 = arith.constant 0 : index
    %c0_0 = arith.constant 0 : index
    %0 = vector.load %arg1[%c0, %c0_0] : memref<4x784xf32, #tpu.memory_space<vmem>>, vector<4x784xf32>
    %1 = arith.truncf %0 : vector<4x784xf32> to vector<4x784xbf16>
    %c0_1 = arith.constant 0 : index
    %c0_2 = arith.constant 0 : index
    %2 = vector.load %arg2[%c0_1, %c0_2] : memref<784x256xbf16, #tpu.memory_space<vmem>>, vector<784x256xbf16>
    %cst = arith.constant dense<0.000000e+00> : vector<4x256xf32>
    %3 = tpu.matmul %1, %2, %cst {dimension_numbers = #tpu.dot_dimension_numbers<[1], [0], [0], [1], [0, 0, 1, 1], [], []>} : vector<4x784xbf16>, vector<784x256xbf16>, vector<4x256xf32> -> vector<4x256xf32>
    %c0_3 = arith.constant 0 : index
    %c0_4 = arith.constant 0 : index
    %4 = vector.load %arg3[%c0_3, %c0_4] : memref<1x256xf32, #tpu.memory_space<vmem>>, vector<1x256xf32>
    %5 = vector.broadcast %4 : vector<1x256xf32> to vector<4x256xf32>
    %6 = arith.addf %3, %5 : vector<4x256xf32>
    %cst_5 = arith.constant 0.000000e+00 : f32
    %7 = vector.broadcast %cst_5 : f32 to vector<4x256xf32>
    %8 = arith.maximumf %6, %7 : vector<4x256xf32>
    %9 = arith.truncf %8 : vector<4x256xf32> to vector<4x256xbf16>
    %c0_6 = arith.constant 0 : index
    %c0_7 = arith.constant 0 : index
    %10 = vector.load %arg4[%c0_6, %c0_7] : memref<256x128xbf16, #tpu.memory_space<vmem>>, vector<256x128xbf16>
    %cst_8 = arith.constant dense<0.000000e+00> : vector<4x128xf32>
    %11 = tpu.matmul %9, %10, %cst_8 {dimension_numbers = #tpu.dot_dimension_numbers<[1], [0], [0], [1], [0, 0, 1, 1], [], []>} : vector<4x256xbf16>, vector<256x128xbf16>, vector<4x128xf32> -> vector<4x128xf32>
    %c0_9 = arith.constant 0 : index
    %c0_10 = arith.constant 0 : index
    %12 = vector.load %arg5[%c0_9, %c0_10] : memref<1x128xf32, #tpu.memory_space<vmem>>, vector<1x128xf32>
    %13 = vector.broadcast %12 : vector<1x128xf32> to vector<4x128xf32>
    %14 = arith.addf %11, %13 : vector<4x128xf32>
    %15 = arith.truncf %14 : vector<4x128xf32> to vector<4x128xbf16>
    %c0_11 = arith.constant 0 : index
    %c0_12 = arith.constant 0 : index
    %16 = vector.load %arg6[%c0_11, %c0_12] : memref<4x128xbf16, #tpu.memory_space<vmem>>, vector<4x128xbf16>
    tpu.vector_store %arg6[%c0_11, %c0_12], %15 {strides = array<i32>} : memref<4x128xbf16, #tpu.memory_space<vmem>>, vector<4x128xbf16>,
    return
  }
  func.func @transform_0(%arg0: i32) -> (i32, i32) {
    %c0_i32 = arith.constant 0 : i32
    %c0_i32_0 = arith.constant 0 : i32
    return %arg0, %c0_i32 : i32, i32
  }
  func.func @transform_1(%arg0: i32) -> (i32, i32) {
    %c0_i32 = arith.constant 0 : i32
    %c0_i32_0 = arith.constant 0 : i32
    %c0_i32_1 = arith.constant 0 : i32
    return %c0_i32, %c0_i32_0 : i32, i32
  }
  func.func @transform_2(%arg0: i32) -> (i32, i32) {
    %c0_i32 = arith.constant 0 : i32
    %c0_i32_0 = arith.constant 0 : i32
    %c0_i32_1 = arith.constant 0 : i32
    return %c0_i32, %c0_i32_0 : i32, i32
  }
  func.func @transform_3(%arg0: i32) -> (i32, i32) {
    %c0_i32 = arith.constant 0 : i32
    %c0_i32_0 = arith.constant 0 : i32
    %c0_i32_1 = arith.constant 0 : i32
    return %c0_i32, %c0_i32_0 : i32, i32
  }
  func.func @transform_4(%arg0: i32) -> (i32, i32) {
    %c0_i32 = arith.constant 0 : i32
    %c0_i32_0 = arith.constant 0 : i32
    %c0_i32_1 = arith.constant 0 : i32
    return %c0_i32, %c0_i32_0 : i32, i32
  }
  func.func @transform_5(%arg0: i32) -> (i32, i32) {
    %c0_i32 = arith.constant 0 : i32
    %c0_i32_0 = arith.constant 0 : i32
    return %arg0, %c0_i32 : i32, i32
  }
}

</mosaic_0001>

<llo_original>
// kernel: tpu_custom_call.1
$region0: #{tpu_custom_call.1}
  #allocation0 [shape = 'u32[]', space=smem, size = 0x4, offset = 0x4, fixed_abs, tag = 'smem constant byte address 0x4 - core index']
  #allocation1 [shape = 'u32[144,128]{1,0:T(1,128)}', space=vmem, size = 0x12000, scoped, tag = 'internal scratch']
  %s0 = inlined_call_operand.hbm [shape: f32[4,784], index: 0, kind: input, shape index: {}]
  %s1 = inlined_call_operand.hbm [shape: bf16[784,256], index: 1, kind: input, shape index: {}]
  %s2 = inlined_call_operand.vmem [shape: f32[1,256], index: 2, kind: input, shape index: {}]
  %s3 = inlined_call_operand.hbm [shape: bf16[256,128], index: 3, kind: input, shape index: {}]
  %s4 = inlined_call_operand.vmem [shape: f32[1,128], index: 4, kind: input, shape index: {}]
  %s5 = inlined_call_operand.hbm [shape: bf16[4,128], index: 5, kind: output, shape index: {}]
  %s6 = sld [smem:[#allocation0]]
  $region42: #{tpu_custom_call.1} parent=0
    _
  %s8 = ssub.s32 1, %s6
  %s9 = scalar_select 0, %s8, %s6
  $region1: #{tpu_custom_call.1} parent=0
    #allocation2 [shape = 'u8[14336]{0}', space=vmem, size = 0x3800, scoped, tag = 'input window, operand 0, single buffered']
    #allocation3 [shape = 's32[1]{0}', space=sflag, size = 0x4, scoped, tag = 'scoped memory for tpu_custom_call.1']
    #allocation4 [shape = 's32[1]{0}', space=sflag, size = 0x4, scoped, tag = 'scoped memory for tpu_custom_call.1']
    #allocation5 [shape = 'u8[401408]{0}', space=vmem, size = 0x62000, scoped, tag = 'input window, operand 1, single buffered']
    #allocation6 [shape = 's32[1]{0}', space=sflag, size = 0x4, scoped, tag = 'scoped memory for tpu_custom_call.1']
    #allocation7 [shape = 'u8[65536]{0}', space=vmem, size = 0x10000, scoped, tag = 'input window, operand 3, single buffered']
    #allocation8 [shape = 'u8[1024]{0}', space=vmem, size = 0x400, scoped, tag = 'output window, operand 0, single buffered']
    %10 = vsyncpa [#allocation3], 0
    %11 = vsyncpa [#allocation6], 0
    %12 = vsyncpa [#allocation4], 0
    // Predicated region
    $region2: #{tpu_custom_call.1} parent=1 // pred_check
      _
    $region3: #{tpu_custom_call.1} parent=1 // pred_check_branch
      %14 = sbr.rel (0) target = $region5
    $region4: #{tpu_custom_call.1} parent=1 // pred_region
      %s16 = ssub.s32 448, 448
      %17 = vsyncadd [#allocation3], %s16
      %s19 = sshll.u32 [#allocation2], 4
      %s20 = int_to_ptr.vmem [resolvable:$true] %s19
      %22 = dma.hbm_to_vmem [thread:$0]  %s0, 448, %s20, [#allocation3]
    $region5: #{tpu_custom_call.1} parent=1 // pred_fallthru
      _
    // Predicated region
    $region6: #{tpu_custom_call.1} parent=1 // pred_check
      _
    $region7: #{tpu_custom_call.1} parent=1 // pred_check_branch
      %24 = sbr.rel (0) target = $region9
    $region8: #{tpu_custom_call.1} parent=1 // pred_region
      %s26 = ssub.s32 12544, 12544
      %27 = vsyncadd [#allocation6], %s26
      %s28 = sshll.u32 [#allocation5], 4
      %s29 = int_to_ptr.vmem [resolvable:$true] %s28
      %34 = dma.hbm_to_vmem [thread:$0]  %s1, 12544, %s29, [#allocation6], 128, 128, 8
    $region9: #{tpu_custom_call.1} parent=1 // pred_fallthru
      _
    // Predicated region
    $region10: #{tpu_custom_call.1} parent=1 // pred_check
      _
    $region11: #{tpu_custom_call.1} parent=1 // pred_check_branch
      %36 = sbr.rel (0) target = $region13
    $region12: #{tpu_custom_call.1} parent=1 // pred_region
      _
    $region13: #{tpu_custom_call.1} parent=1 // pred_fallthru
      _
    // Predicated region
    $region14: #{tpu_custom_call.1} parent=1 // pred_check
      _
    $region15: #{tpu_custom_call.1} parent=1 // pred_check_branch
      %38 = sbr.rel (0) target = $region17
    $region16: #{tpu_custom_call.1} parent=1 // pred_region
      %s40 = ssub.s32 2048, 2048
      %41 = vsyncadd [#allocation6], %s40
      %s42 = sshll.u32 [#allocation7], 4
      %s43 = int_to_ptr.vmem [resolvable:$true] %s42
      %48 = dma.hbm_to_vmem [thread:$0]  %s3, 2048, %s43, [#allocation6], 64, 64, 4
    $region17: #{tpu_custom_call.1} parent=1 // pred_fallthru
      _
    // Predicated region
    $region18: #{tpu_custom_call.1} parent=1 // pred_check
      _
    $region19: #{tpu_custom_call.1} parent=1 // pred_check_branch
      %50 = sbr.rel (0) target = $region21
    $region20: #{tpu_custom_call.1} parent=1 // pred_region
      _
    $region21: #{tpu_custom_call.1} parent=1 // pred_fallthru
      _
    // Predicated region
    $region22: #{tpu_custom_call.1} parent=1 // pred_check
      _
    $region23: #{tpu_custom_call.1} parent=1 // pred_check_branch
      %52 = sbr.rel (0) target = $region25
    $region24: #{tpu_custom_call.1} parent=1 // pred_region
      %53 = dma.done [#allocation3], 448
    $region25: #{tpu_custom_call.1} parent=1 // pred_fallthru
      _
    // Predicated region
    $region26: #{tpu_custom_call.1} parent=1 // pred_check
      _
    $region27: #{tpu_custom_call.1} parent=1 // pred_check_branch
      %55 = sbr.rel (0) target = $region29
    $region28: #{tpu_custom_call.1} parent=1 // pred_region
      %56 = dma.done [#allocation6], 12544
    $region29: #{tpu_custom_call.1} parent=1 // pred_fallthru
      _
    // Predicated region
    $region30: #{tpu_custom_call.1} parent=1 // pred_check
      _
    $region31: #{tpu_custom_call.1} parent=1 // pred_check_branch
      %58 = sbr.rel (0) target = $region33
    $region32: #{tpu_custom_call.1} parent=1 // pred_region
      %59 = dma.done [#allocation6], 2048
    $region33: #{tpu_custom_call.1} parent=1 // pred_fallthru
      _
    %v61 = vld [vmem:[#allocation2] sm:$0xff]
    %v62 = vld [vmem:[#allocation2 + $0x8] sm:$0xff]
    %v63 = vld [vmem:[#allocation2 + $0x10] sm:$0xff]
    %v64 = vld [vmem:[#allocation2 + $0x18] sm:$0xf]
    %v68 = vcombine.high %v61, %v61
    %v69 = vcombine.high %v62, %v62
    %v70 = vcombine.high %v63, %v63
    %v74 = vpack.c.bf16 %v61, %v61
    %v75 = vpack.c.bf16 %v68, %v68
    %v76 = vpack.c.bf16 %v62, %v62
    %v77 = vpack.c.bf16 %v69, %v69
    %v78 = vpack.c.bf16 %v63, %v63
    %v79 = vpack.c.bf16 %v70, %v70
    %v80 = vpack.c.bf16 %v64, %v64
    %v81 = vld [vmem:[#allocation5] sm:$0xff]
    %v82 = vld [vmem:[#allocation5 + $0x8] sm:$0xff]
    %v83 = vld [vmem:[#allocation5 + $0x10] sm:$0xff]
    %v84 = vld [vmem:[#allocation5 + $0x18] sm:$0xff]
    %v85 = vld [vmem:[#allocation5 + $0x20] sm:$0xff]
    %v86 = vld [vmem:[#allocation5 + $0x28] sm:$0xff]
    %v87 = vld [vmem:[#allocation5 + $0x30] sm:$0xff]
    %v88 = vld [vmem:[#allocation5 + $0x38] sm:$0xff]
    %v89 = vld [vmem:[#allocation5 + $0x40] sm:$0xff]
    %v90 = vld [vmem:[#allocation5 + $0x48] sm:$0xff]
    %v91 = vld [vmem:[#allocation5 + $0x50] sm:$0xff]
    %v92 = vld [vmem:[#allocation5 + $0x58] sm:$0xff]
    %v93 = vld [vmem:[#allocation5 + $0x60] sm:$0xff]
    %v94 = vld [vmem:[#allocation5 + $0x68] sm:$0xff]
    %v95 = vld [vmem:[#allocation5 + $0x70] sm:$0xff]
    %v96 = vld [vmem:[#allocation5 + $0x78] sm:$0xff]
    %v97 = vld [vmem:[#allocation5 + $0x80] sm:$0xff]
    %v98 = vld [vmem:[#allocation5 + $0x88] sm:$0xff]
    %v99 = vld [vmem:[#allocation5 + $0x90] sm:$0xff]
    %v100 = vld [vmem:[#allocation5 + $0x98] sm:$0xff]
    %v101 = vld [vmem:[#allocation5 + $0xa0] sm:$0xff]
    %v102 = vld [vmem:[#allocation5 + $0xa8] sm:$0xff]
    %v103 = vld [vmem:[#allocation5 + $0xb0] sm:$0xff]
    %v104 = vld [vmem:[#allocation5 + $0xb8] sm:$0xff]
    %v105 = vld [vmem:[#allocation5 + $0xc0] sm:$0xff]
    %v106 = vld [vmem:[#allocation5 + $0xc8] sm:$0xff]
    %v107 = vld [vmem:[#allocation5 + $0xd0] sm:$0xff]
    %v108 = vld [vmem:[#allocation5 + $0xd8] sm:$0xff]
    %v109 = vld [vmem:[#allocation5 + $0xe0] sm:$0xff]
    %v110 = vld [vmem:[#allocation5 + $0xe8] sm:$0xff]
    %v111 = vld [vmem:[#allocation5 + $0xf0] sm:$0xff]
    %v112 = vld [vmem:[#allocation5 + $0xf8] sm:$0xff]
    %v113 = vld [vmem:[#allocation5 + $0x100] sm:$0xff]
    %v114 = vld [vmem:[#allocation5 + $0x108] sm:$0xff]
    %v115 = vld [vmem:[#allocation5 + $0x110] sm:$0xff]
    %v116 = vld [vmem:[#allocation5 + $0x118] sm:$0xff]
    %v117 = vld [vmem:[#allocation5 + $0x120] sm:$0xff]
    %v118 = vld [vmem:[#allocation5 + $0x128] sm:$0xff]
    %v119 = vld [vmem:[#allocation5 + $0x130] sm:$0xff]
    %v120 = vld [vmem:[#allocation5 + $0x138] sm:$0xff]
    %v121 = vld [vmem:[#allocation5 + $0x140] sm:$0xff]
    %v122 = vld [vmem:[#allocation5 + $0x148] sm:$0xff]
    %v123 = vld [vmem:[#allocation5 + $0x150] sm:$0xff]
    %v124 = vld [vmem:[#allocation5 + $0x158] sm:$0xff]
    %v125 = vld [vmem:[#allocation5 + $0x160] sm:$0xff]
    %v126 = vld [vmem:[#allocation5 + $0x168] sm:$0xff]
    %v127 = vld [vmem:[#allocation5 + $0x170] sm:$0xff]
    %v128 = vld [vmem:[#allocation5 + $0x178] sm:$0xff]
    %v129 = vld [vmem:[#allocation5 + $0x180] sm:$0xff]
    %v130 = vld [vmem:[#allocation5 + $0x188] sm:$0xff]
    %v131 = vld [vmem:[#allocation5 + $0x190] sm:$0xff]
    %v132 = vld [vmem:[#allocation5 + $0x198] sm:$0xff]
    %v133 = vld [vmem:[#allocation5 + $0x1a0] sm:$0xff]
    %v134 = vld [vmem:[#allocation5 + $0x1a8] sm:$0xff]
    %v135 = vld [vmem:[#allocation5 + $0x1b0] sm:$0xff]
    %v136 = vld [vmem:[#allocation5 + $0x1b8] sm:$0xff]
    %v137 = vld [vmem:[#allocation5 + $0x1c0] sm:$0xff]
    %v138 = vld [vmem:[#allocation5 + $0x1c8] sm:$0xff]
    %v139 = vld [vmem:[#allocation5 + $0x1d0] sm:$0xff]
    %v140 = vld [vmem:[#allocation5 + $0x1d8] sm:$0xff]
    %v141 = vld [vmem:[#allocation5 + $0x1e0] sm:$0xff]
    %v142 = vld [vmem:[#allocation5 + $0x1e8] sm:$0xff]
    %v143 = vld [vmem:[#allocation5 + $0x1f0] sm:$0xff]
    %v144 = vld [vmem:[#allocation5 + $0x1f8] sm:$0xff]
    %v145 = vld [vmem:[#allocation5 + $0x200] sm:$0xff]
    %v146 = vld [vmem:[#allocation5 + $0x208] sm:$0xff]
    %v147 = vld [vmem:[#allocation5 + $0x210] sm:$0xff]
    %v148 = vld [vmem:[#allocation5 + $0x218] sm:$0xff]
    %v149 = vld [vmem:[#allocation5 + $0x220] sm:$0xff]
    %v150 = vld [vmem:[#allocation5 + $0x228] sm:$0xff]
    %v151 = vld [vmem:[#allocation5 + $0x230] sm:$0xff]
    %v152 = vld [vmem:[#allocation5 + $0x238] sm:$0xff]
    %v153 = vld [vmem:[#allocation5 + $0x240] sm:$0xff]
    %v154 = vld [vmem:[#allocation5 + $0x248] sm:$0xff]
    %v155 = vld [vmem:[#allocation5 + $0x250] sm:$0xff]
    %v156 = vld [vmem:[#allocation5 + $0x258] sm:$0xff]
    %v157 = vld [vmem:[#allocation5 + $0x260] sm:$0xff]
    %v158 = vld [vmem:[#allocation5 + $0x268] sm:$0xff]
    %v159 = vld [vmem:[#allocation5 + $0x270] sm:$0xff]
    %v160 = vld [vmem:[#allocation5 + $0x278] sm:$0xff]
    %v161 = vld [vmem:[#allocation5 + $0x280] sm:$0xff]
    %v162 = vld [vmem:[#allocation5 + $0x288] sm:$0xff]
    %v163 = vld [vmem:[#allocation5 + $0x290] sm:$0xff]
    %v164 = vld [vmem:[#allocation5 + $0x298] sm:$0xff]
    %v165 = vld [vmem:[#allocation5 + $0x2a0] sm:$0xff]
    %v166 = vld [vmem:[#allocation5 + $0x2a8] sm:$0xff]
    %v167 = vld [vmem:[#allocation5 + $0x2b0] sm:$0xff]
    %v168 = vld [vmem:[#allocation5 + $0x2b8] sm:$0xff]
    %v169 = vld [vmem:[#allocation5 + $0x2c0] sm:$0xff]
    %v170 = vld [vmem:[#allocation5 + $0x2c8] sm:$0xff]
    %v171 = vld [vmem:[#allocation5 + $0x2d0] sm:$0xff]
    %v172 = vld [vmem:[#allocation5 + $0x2d8] sm:$0xff]
    %v173 = vld [vmem:[#allocation5 + $0x2e0] sm:$0xff]
    %v174 = vld [vmem:[#allocation5 + $0x2e8] sm:$0xff]
    %v175 = vld [vmem:[#allocation5 + $0x2f0] sm:$0xff]
    %v176 = vld [vmem:[#allocation5 + $0x2f8] sm:$0xff]
    %v177 = vld [vmem:[#allocation5 + $0x300] sm:$0xff]
    %v178 = vld [vmem:[#allocation5 + $0x308] sm:$0xff]
    %v179 = vld [vmem:[%s2] sm:$0x3]
    %v181 = vlaneseq
    %v182 = vshrl.u32 %v181, 7
    %v183 = vsub.s32 0, %v182
    %v184 = vrot.slane %v179, %v183
    %v185 = vlaneseq
    %v186 = vshrl.u32 %v185, 7
    %v187 = vsub.s32 1, %v186
    %v188 = vrot.slane %v179, %v187
    %v289 = vunpack.c.l.b16 %v81
    %v290 = vunpack.c.h.b16 %v81
    %v291 = vunpack.c.l.b16 %v82
    %v292 = vunpack.c.h.b16 %v82
    %v293 = vunpack.c.l.b16 %v83
    %v294 = vunpack.c.h.b16 %v83
    %v295 = vunpack.c.l.b16 %v84
    %v296 = vunpack.c.h.b16 %v84
    %v297 = vunpack.c.l.b16 %v85
    %v298 = vunpack.c.h.b16 %v85
    %v299 = vunpack.c.l.b16 %v86
    %v300 = vunpack.c.h.b16 %v86
    %v301 = vunpack.c.l.b16 %v87
    %v302 = vunpack.c.h.b16 %v87
    %v303 = vunpack.c.l.b16 %v88
    %v304 = vunpack.c.h.b16 %v88
    %v305 = vunpack.c.l.b16 %v89
    %v306 = vunpack.c.h.b16 %v89
    %v307 = vunpack.c.l.b16 %v90
    %v308 = vunpack.c.h.b16 %v90
    %v309 = vunpack.c.l.b16 %v91
    %v310 = vunpack.c.h.b16 %v91
    %v311 = vunpack.c.l.b16 %v92
    %v312 = vunpack.c.h.b16 %v92
    %v313 = vunpack.c.l.b16 %v93
    %v314 = vunpack.c.h.b16 %v93
    %v315 = vunpack.c.l.b16 %v94
    %v316 = vunpack.c.h.b16 %v94
    %v317 = vunpack.c.l.b16 %v95
    %v318 = vunpack.c.h.b16 %v95
    %v319 = vunpack.c.l.b16 %v96
    %v320 = vunpack.c.h.b16 %v96
    %v321 = vunpack.c.l.b16 %v97
    %v322 = vunpack.c.h.b16 %v97
    %v323 = vunpack.c.l.b16 %v98
    %v324 = vunpack.c.h.b16 %v98
    %v325 = vunpack.c.l.b16 %v99
    %v326 = vunpack.c.h.b16 %v99
    %v327 = vunpack.c.l.b16 %v100
    %v328 = vunpack.c.h.b16 %v100
    %v329 = vunpack.c.l.b16 %v101
    %v330 = vunpack.c.h.b16 %v101
    %v331 = vunpack.c.l.b16 %v102
    %v332 = vunpack.c.h.b16 %v102
    %v333 = vunpack.c.l.b16 %v103
    %v334 = vunpack.c.h.b16 %v103
    %v335 = vunpack.c.l.b16 %v104
    %v336 = vunpack.c.h.b16 %v104
    %v337 = vunpack.c.l.b16 %v105
    %v338 = vunpack.c.h.b16 %v105
    %v339 = vunpack.c.l.b16 %v106
    %v340 = vunpack.c.h.b16 %v106
    %v341 = vunpack.c.l.b16 %v107
    %v342 = vunpack.c.h.b16 %v107
    %v343 = vunpack.c.l.b16 %v108
    %v344 = vunpack.c.h.b16 %v108
    %v345 = vunpack.c.l.b16 %v109
    %v346 = vunpack.c.h.b16 %v109
    %v347 = vunpack.c.l.b16 %v110
    %v348 = vunpack.c.h.b16 %v110
    %v349 = vunpack.c.l.b16 %v111
    %v350 = vunpack.c.h.b16 %v111
    %v351 = vunpack.c.l.b16 %v112
    %v352 = vunpack.c.h.b16 %v112
    %v353 = vunpack.c.l.b16 %v113
    %v354 = vunpack.c.h.b16 %v113
    %v355 = vunpack.c.l.b16 %v114
    %v356 = vunpack.c.h.b16 %v114
    %v357 = vunpack.c.l.b16 %v115
    %v358 = vunpack.c.h.b16 %v115
    %v359 = vunpack.c.l.b16 %v116
    %v360 = vunpack.c.h.b16 %v116
    %v361 = vunpack.c.l.b16 %v117
    %v362 = vunpack.c.h.b16 %v117
    %v363 = vunpack.c.l.b16 %v118
    %v364 = vunpack.c.h.b16 %v118
    %v365 = vunpack.c.l.b16 %v119
    %v366 = vunpack.c.h.b16 %v119
    %v367 = vunpack.c.l.b16 %v120
    %v368 = vunpack.c.h.b16 %v120
    %v369 = vunpack.c.l.b16 %v121
    %v370 = vunpack.c.h.b16 %v121
    %v371 = vunpack.c.l.b16 %v122
    %v372 = vunpack.c.h.b16 %v122
    %v373 = vunpack.c.l.b16 %v123
    %v374 = vunpack.c.h.b16 %v123
    %v375 = vunpack.c.l.b16 %v124
    %v376 = vunpack.c.h.b16 %v124
    %v377 = vunpack.c.l.b16 %v125
    %v378 = vunpack.c.h.b16 %v125
    %v379 = vunpack.c.l.b16 %v126
    %v380 = vunpack.c.h.b16 %v126
    %v381 = vunpack.c.l.b16 %v127
    %v382 = vunpack.c.h.b16 %v127
    %v383 = vunpack.c.l.b16 %v128
    %v384 = vunpack.c.h.b16 %v128
    %v385 = vunpack.c.l.b16 %v129
    %v386 = vunpack.c.h.b16 %v129
    %v387 = vunpack.c.l.b16 %v130
    %v388 = vunpack.c.h.b16 %v130
    %v389 = vunpack.c.l.b16 %v131
    %v390 = vunpack.c.h.b16 %v131
    %v391 = vunpack.c.l.b16 %v132
    %v392 = vunpack.c.h.b16 %v132
    %v393 = vunpack.c.l.b16 %v133
    %v394 = vunpack.c.h.b16 %v133
    %v395 = vunpack.c.l.b16 %v134
    %v396 = vunpack.c.h.b16 %v134
    %v397 = vunpack.c.l.b16 %v135
    %v398 = vunpack.c.h.b16 %v135
    %v399 = vunpack.c.l.b16 %v136
    %v400 = vunpack.c.h.b16 %v136
    %v401 = vunpack.c.l.b16 %v137
    %v402 = vunpack.c.h.b16 %v137
    %v403 = vunpack.c.l.b16 %v138
    %v404 = vunpack.c.h.b16 %v138
    %v405 = vunpack.c.l.b16 %v139
    %v406 = vunpack.c.h.b16 %v139
    %v407 = vunpack.c.l.b16 %v140
    %v408 = vunpack.c.h.b16 %v140
    %v409 = vunpack.c.l.b16 %v141
    %v410 = vunpack.c.h.b16 %v141
    %v411 = vunpack.c.l.b16 %v142
    %v412 = vunpack.c.h.b16 %v142
    %v413 = vunpack.c.l.b16 %v143
    %v414 = vunpack.c.h.b16 %v143
    %v415 = vunpack.c.l.b16 %v144
    %v416 = vunpack.c.h.b16 %v144
    %v417 = vunpack.c.l.b16 %v145
    %v418 = vunpack.c.h.b16 %v145
    %v419 = vunpack.c.l.b16 %v146
    %v420 = vunpack.c.h.b16 %v146
    %v421 = vunpack.c.l.b16 %v147
    %v422 = vunpack.c.h.b16 %v147
    %v423 = vunpack.c.l.b16 %v148
    %v424 = vunpack.c.h.b16 %v148
    %v425 = vunpack.c.l.b16 %v149
    %v426 = vunpack.c.h.b16 %v149
    %v427 = vunpack.c.l.b16 %v150
    %v428 = vunpack.c.h.b16 %v150
    %v429 = vunpack.c.l.b16 %v151
    %v430 = vunpack.c.h.b16 %v151
    %v431 = vunpack.c.l.b16 %v152
    %v432 = vunpack.c.h.b16 %v152
    %v433 = vunpack.c.l.b16 %v153
    %v434 = vunpack.c.h.b16 %v153
    %v435 = vunpack.c.l.b16 %v154
    %v436 = vunpack.c.h.b16 %v154
    %v437 = vunpack.c.l.b16 %v155
    %v438 = vunpack.c.h.b16 %v155
    %v439 = vunpack.c.l.b16 %v156
    %v440 = vunpack.c.h.b16 %v156
    %v441 = vunpack.c.l.b16 %v157
    %v442 = vunpack.c.h.b16 %v157
    %v443 = vunpack.c.l.b16 %v158
    %v444 = vunpack.c.h.b16 %v158
    %v445 = vunpack.c.l.b16 %v159
    %v446 = vunpack.c.h.b16 %v159
    %v447 = vunpack.c.l.b16 %v160
    %v448 = vunpack.c.h.b16 %v160
    %v449 = vunpack.c.l.b16 %v161
    %v450 = vunpack.c.h.b16 %v161
    %v451 = vunpack.c.l.b16 %v162
    %v452 = vunpack.c.h.b16 %v162
    %v453 = vunpack.c.l.b16 %v163
    %v454 = vunpack.c.h.b16 %v163
    %v455 = vunpack.c.l.b16 %v164
    %v456 = vunpack.c.h.b16 %v164
    %v457 = vunpack.c.l.b16 %v165
    %v458 = vunpack.c.h.b16 %v165
    %v459 = vunpack.c.l.b16 %v166
    %v460 = vunpack.c.h.b16 %v166
    %v461 = vunpack.c.l.b16 %v167
    %v462 = vunpack.c.h.b16 %v167
    %v463 = vunpack.c.l.b16 %v168
    %v464 = vunpack.c.h.b16 %v168
    %v465 = vunpack.c.l.b16 %v169
    %v466 = vunpack.c.h.b16 %v169
    %v467 = vunpack.c.l.b16 %v170
    %v468 = vunpack.c.h.b16 %v170
    %v469 = vunpack.c.l.b16 %v171
    %v470 = vunpack.c.h.b16 %v171
    %v471 = vunpack.c.l.b16 %v172
    %v472 = vunpack.c.h.b16 %v172
    %v473 = vunpack.c.l.b16 %v173
    %v474 = vunpack.c.h.b16 %v173
    %v475 = vunpack.c.l.b16 %v174
    %v476 = vunpack.c.h.b16 %v174
    %v477 = vunpack.c.l.b16 %v175
    %v478 = vunpack.c.h.b16 %v175
    %v479 = vunpack.c.l.b16 %v176
    %v480 = vunpack.c.h.b16 %v176
    %v481 = vunpack.c.l.b16 %v177
    %v482 = vunpack.c.h.b16 %v177
    %v483 = vunpack.c.l.b16 %v178
    %v484 = vunpack.c.h.b16 %v178
    %v485 = vpack.c.b16 %v291, %v289
    %v486 = vpack.c.b16 %v292, %v290
    %v487 = vpack.c.b16 %v295, %v293
    %v488 = vpack.c.b16 %v296, %v294
    %v489 = vpack.c.b16 %v299, %v297
    %v490 = vpack.c.b16 %v300, %v298
    %v491 = vpack.c.b16 %v303, %v301
    %v492 = vpack.c.b16 %v304, %v302
    %v493 = vpack.c.b16 %v307, %v305
    %v494 = vpack.c.b16 %v308, %v306
    %v495 = vpack.c.b16 %v311, %v309
    %v496 = vpack.c.b16 %v312, %v310
    %v497 = vpack.c.b16 %v315, %v313
    %v498 = vpack.c.b16 %v316, %v314
    %v499 = vpack.c.b16 %v319, %v317
    %v500 = vpack.c.b16 %v320, %v318
    %v501 = vpack.c.b16 %v323, %v321
    %v502 = vpack.c.b16 %v324, %v322
    %v503 = vpack.c.b16 %v327, %v325
    %v504 = vpack.c.b16 %v328, %v326
    %v505 = vpack.c.b16 %v331, %v329
    %v506 = vpack.c.b16 %v332, %v330
    %v507 = vpack.c.b16 %v335, %v333
    %v508 = vpack.c.b16 %v336, %v334
    %v509 = vpack.c.b16 %v339, %v337
    %v510 = vpack.c.b16 %v340, %v338
    %v511 = vpack.c.b16 %v343, %v341
    %v512 = vpack.c.b16 %v344, %v342
    %v513 = vpack.c.b16 %v347, %v345
    %v514 = vpack.c.b16 %v348, %v346
    %v515 = vpack.c.b16 %v351, %v349
    %v516 = vpack.c.b16 %v352, %v350
    %v517 = vpack.c.b16 %v355, %v353
    %v518 = vpack.c.b16 %v356, %v354
    %v519 = vpack.c.b16 %v359, %v357
    %v520 = vpack.c.b16 %v360, %v358
    %v521 = vpack.c.b16 %v363, %v361
    %v522 = vpack.c.b16 %v364, %v362
    %v523 = vpack.c.b16 %v367, %v365
    %v524 = vpack.c.b16 %v368, %v366
    %v525 = vpack.c.b16 %v371, %v369
    %v526 = vpack.c.b16 %v372, %v370
    %v527 = vpack.c.b16 %v375, %v373
    %v528 = vpack.c.b16 %v376, %v374
    %v529 = vpack.c.b16 %v379, %v377
    %v530 = vpack.c.b16 %v380, %v378
    %v531 = vpack.c.b16 %v383, %v381
    %v532 = vpack.c.b16 %v384, %v382
    %v533 = vpack.c.b16 %v387, %v385
    %v534 = vpack.c.b16 %v388, %v386
    %v535 = vpack.c.b16 %v391, %v389
    %v536 = vpack.c.b16 %v392, %v390
    %v537 = vpack.c.b16 %v395, %v393
    %v538 = vpack.c.b16 %v396, %v394
    %v539 = vpack.c.b16 %v399, %v397
    %v540 = vpack.c.b16 %v400, %v398
    %v541 = vpack.c.b16 %v403, %v401
    %v542 = vpack.c.b16 %v404, %v402
    %v543 = vpack.c.b16 %v407, %v405
    %v544 = vpack.c.b16 %v408, %v406
    %v545 = vpack.c.b16 %v411, %v409
    %v546 = vpack.c.b16 %v412, %v410
    %v547 = vpack.c.b16 %v415, %v413
    %v548 = vpack.c.b16 %v416, %v414
    %v549 = vpack.c.b16 %v419, %v417
    %v550 = vpack.c.b16 %v420, %v418
    %v551 = vpack.c.b16 %v423, %v421
    %v552 = vpack.c.b16 %v424, %v422
    %v553 = vpack.c.b16 %v427, %v425
    %v554 = vpack.c.b16 %v428, %v426
    %v555 = vpack.c.b16 %v431, %v429
    %v556 = vpack.c.b16 %v432, %v430
    %v557 = vpack.c.b16 %v435, %v433
    %v558 = vpack.c.b16 %v436, %v434
    %v559 = vpack.c.b16 %v439, %v437
    %v560 = vpack.c.b16 %v440, %v438
    %v561 = vpack.c.b16 %v443, %v441
    %v562 = vpack.c.b16 %v444, %v442
    %v563 = vpack.c.b16 %v447, %v445
    %v564 = vpack.c.b16 %v448, %v446
    %v565 = vpack.c.b16 %v451, %v449
    %v566 = vpack.c.b16 %v452, %v450
    %v567 = vpack.c.b16 %v455, %v453
    %v568 = vpack.c.b16 %v456, %v454
    %v569 = vpack.c.b16 %v459, %v457
    %v570 = vpack.c.b16 %v460, %v458
    %v571 = vpack.c.b16 %v463, %v461
    %v572 = vpack.c.b16 %v464, %v462
    %v573 = vpack.c.b16 %v467, %v465
    %v574 = vpack.c.b16 %v468, %v466
    %v575 = vpack.c.b16 %v471, %v469
    %v576 = vpack.c.b16 %v472, %v470
    %v577 = vpack.c.b16 %v475, %v473
    %v578 = vpack.c.b16 %v476, %v474
    %v579 = vpack.c.b16 %v479, %v477
    %v580 = vpack.c.b16 %v480, %v478
    %v581 = vpack.c.b16 %v483, %v481
    %v582 = vpack.c.b16 %v484, %v482
    %vm681 = vcmask 130048
    %v683 = vsel %vm681, %v80, 0
    %685 = vmatprep.subr.bf16.mxu0 %v486
    %686 = vmatpush1.bf16.msra.mxu0 %v485
    %687 = vmatprep.subr.bf16.mxu0 %v488
    %688 = vmatpush1.bf16.msra.mxu0 %v487
    %689 = vmatprep.subr.bf16.mxu0 %v490
    %690 = vmatpush1.bf16.msra.mxu0 %v489
    %691 = vmatprep.subr.bf16.mxu0 %v492
    %692 = vmatpush1.bf16.msra.mxu0 %v491
    %693 = vmatprep.subr.bf16.mxu0 %v494
    %694 = vmatpush1.bf16.msra.mxu0 %v493
    %695 = vmatprep.subr.bf16.mxu0 %v496
    %696 = vmatpush1.bf16.msra.mxu0 %v495
    %697 = vmatprep.subr.bf16.mxu0 %v498
    %698 = vmatpush1.bf16.msra.mxu0 %v497
    %699 = vmatprep.subr.bf16.mxu0 %v500
    %700 = vmatpush1.bf16.msra.mxu0 %v499
    %701 = vmatprep.subr.bf16.mxu0 %v502
    %702 = vmatpush1.bf16.msra.mxu0 %v501
    %703 = vmatprep.subr.bf16.mxu0 %v504
    %704 = vmatpush1.bf16.msra.mxu0 %v503
    %705 = vmatprep.subr.bf16.mxu0 %v506
    %706 = vmatpush1.bf16.msra.mxu0 %v505
    %707 = vmatprep.subr.bf16.mxu0 %v508
    %708 = vmatpush1.bf16.msra.mxu0 %v507
    %709 = vmatprep.subr.bf16.mxu0 %v510
    %710 = vmatpush1.bf16.msra.mxu0 %v509
    %711 = vmatprep.subr.bf16.mxu0 %v512
    %712 = vmatpush1.bf16.msra.mxu0 %v511
    %713 = vmatprep.subr.bf16.mxu0 %v514
    %714 = vmatpush1.bf16.msra.mxu0 %v513
    %715 = vmatprep.subr.bf16.mxu0 %v516
    %716 = vmatpush1.bf16.msra.mxu0 %v515
    %717 = vmatprep.mubr.bf16.mxu0 %v75
    %718 = vmatmul.mubr.bf16.gmra.mrb[0].mxu0 %v74
    %v719 = vpop.f32.mrb[0].mxu0
    %v720 = vadd.f32 %v184, %v719
    %v721 = vpop.f32.mrb[0].mxu0
    %v722 = vadd.f32 %v188, %v721
    %v723 = vpop.f32.mrb[0].mxu0
    %v724 = vpop.f32.mrb[0].mxu0
    %725 = vdwg.mxu0
    %726 = vmatprep.subr.bf16.mxu0 %v518
    %727 = vmatpush1.bf16.msra.mxu0 %v517
    %728 = vmatprep.subr.bf16.mxu0 %v520
    %729 = vmatpush1.bf16.msra.mxu0 %v519
    %730 = vmatprep.subr.bf16.mxu0 %v522
    %731 = vmatpush1.bf16.msra.mxu0 %v521
    %732 = vmatprep.subr.bf16.mxu0 %v524
    %733 = vmatpush1.bf16.msra.mxu0 %v523
    %734 = vmatprep.subr.bf16.mxu0 %v526
    %735 = vmatpush1.bf16.msra.mxu0 %v525
    %736 = vmatprep.subr.bf16.mxu0 %v528
    %737 = vmatpush1.bf16.msra.mxu0 %v527
    %738 = vmatprep.subr.bf16.mxu0 %v530
    %739 = vmatpush1.bf16.msra.mxu0 %v529
    %740 = vmatprep.subr.bf16.mxu0 %v532
    %741 = vmatpush1.bf16.msra.mxu0 %v531
    %742 = vmatprep.subr.bf16.mxu0 %v534
    %743 = vmatpush1.bf16.msra.mxu0 %v533
    %744 = vmatprep.subr.bf16.mxu0 %v536
    %745 = vmatpush1.bf16.msra.mxu0 %v535
    %746 = vmatprep.subr.bf16.mxu0 %v538
    %747 = vmatpush1.bf16.msra.mxu0 %v537
    %748 = vmatprep.subr.bf16.mxu0 %v540
    %749 = vmatpush1.bf16.msra.mxu0 %v539
    %750 = vmatprep.subr.bf16.mxu0 %v542
    %751 = vmatpush1.bf16.msra.mxu0 %v541
    %752 = vmatprep.subr.bf16.mxu0 %v544
    %753 = vmatpush1.bf16.msra.mxu0 %v543
    %754 = vmatprep.subr.bf16.mxu0 %v546
    %755 = vmatpush1.bf16.msra.mxu0 %v545
    %756 = vmatprep.subr.bf16.mxu0 %v548
    %757 = vmatpush1.bf16.msra.mxu0 %v547
    %758 = vmatprep.mubr.bf16.mxu0 %v77
    %759 = vmatmul.mubr.bf16.gmra.mrb[0].mxu0 %v76
    %v760 = vpop.f32.mrb[0].mxu0
    %v761 = vadd.f32 %v720, %v760
    %v762 = vpop.f32.mrb[0].mxu0
    %v763 = vadd.f32 %v722, %v762
    %v764 = vpop.f32.mrb[0].mxu0
    %v765 = vpop.f32.mrb[0].mxu0
    %766 = vdwg.mxu0
    %767 = vmatprep.subr.bf16.mxu0 %v550
    %768 = vmatpush1.bf16.msra.mxu0 %v549
    %769 = vmatprep.subr.bf16.mxu0 %v552
    %770 = vmatpush1.bf16.msra.mxu0 %v551
    %771 = vmatprep.subr.bf16.mxu0 %v554
    %772 = vmatpush1.bf16.msra.mxu0 %v553
    %773 = vmatprep.subr.bf16.mxu0 %v556
    %774 = vmatpush1.bf16.msra.mxu0 %v555
    %775 = vmatprep.subr.bf16.mxu0 %v558
    %776 = vmatpush1.bf16.msra.mxu0 %v557
    %777 = vmatprep.subr.bf16.mxu0 %v560
    %778 = vmatpush1.bf16.msra.mxu0 %v559
    %779 = vmatprep.subr.bf16.mxu0 %v562
    %780 = vmatpush1.bf16.msra.mxu0 %v561
    %781 = vmatprep.subr.bf16.mxu0 %v564
    %782 = vmatpush1.bf16.msra.mxu0 %v563
    %783 = vmatprep.subr.bf16.mxu0 %v566
    %784 = vmatpush1.bf16.msra.mxu0 %v565
    %785 = vmatprep.subr.bf16.mxu0 %v568
    %786 = vmatpush1.bf16.msra.mxu0 %v567
    %787 = vmatprep.subr.bf16.mxu0 %v570
    %788 = vmatpush1.bf16.msra.mxu0 %v569
    %789 = vmatprep.subr.bf16.mxu0 %v572
    %790 = vmatpush1.bf16.msra.mxu0 %v571
    %791 = vmatprep.subr.bf16.mxu0 %v574
    %792 = vmatpush1.bf16.msra.mxu0 %v573
    %793 = vmatprep.subr.bf16.mxu0 %v576
    %794 = vmatpush1.bf16.msra.mxu0 %v575
    %795 = vmatprep.subr.bf16.mxu0 %v578
    %796 = vmatpush1.bf16.msra.mxu0 %v577
    %797 = vmatprep.subr.bf16.mxu0 %v580
    %798 = vmatpush1.bf16.msra.mxu0 %v579
    %799 = vmatprep.mubr.bf16.mxu0 %v79
    %800 = vmatmul.mubr.bf16.gmra.mrb[0].mxu0 %v78
    %v801 = vpop.f32.mrb[0].mxu0
    %v802 = vadd.f32 %v761, %v801
    %v803 = vpop.f32.mrb[0].mxu0
    %v804 = vadd.f32 %v763, %v803
    %v805 = vpop.f32.mrb[0].mxu0
    %v806 = vpop.f32.mrb[0].mxu0
    %807 = vdwg.mxu0
    %808 = vmatprep.subr.bf16.mxu0 %v582
    %809 = vmatpush1.bf16.msra.mxu0 %v581
    %810 = vmatprep.subr.bf16.mxu0 0
    %811 = vmatpush1.bf16.msra.mxu0 0
    %812 = vmatprep.subr.bf16.mxu0 0
    %813 = vmatpush1.bf16.msra.mxu0 0
    %814 = vmatprep.subr.bf16.mxu0 0
    %815 = vmatpush1.bf16.msra.mxu0 0
    %816 = vmatprep.subr.bf16.mxu0 0
    %817 = vmatpush1.bf16.msra.mxu0 0
    %818 = vmatprep.subr.bf16.mxu0 0
    %819 = vmatpush1.bf16.msra.mxu0 0
    %820 = vmatprep.subr.bf16.mxu0 0
    %821 = vmatpush1.bf16.msra.mxu0 0
    %822 = vmatprep.subr.bf16.mxu0 0
    %823 = vmatpush1.bf16.msra.mxu0 0
    %824 = vmatprep.subr.bf16.mxu0 0
    %825 = vmatpush1.bf16.msra.mxu0 0
    %826 = vmatprep.subr.bf16.mxu0 0
    %827 = vmatpush1.bf16.msra.mxu0 0
    %828 = vmatprep.subr.bf16.mxu0 0
    %829 = vmatpush1.bf16.msra.mxu0 0
    %830 = vmatprep.subr.bf16.mxu0 0
    %831 = vmatpush1.bf16.msra.mxu0 0
    %832 = vmatprep.subr.bf16.mxu0 0
    %833 = vmatpush1.bf16.msra.mxu0 0
    %834 = vmatprep.subr.bf16.mxu0 0
    %835 = vmatpush1.bf16.msra.mxu0 0
    %836 = vmatprep.subr.bf16.mxu0 0
    %837 = vmatpush1.bf16.msra.mxu0 0
    %838 = vmatprep.subr.bf16.mxu0 0
    %839 = vmatpush1.bf16.msra.mxu0 0
    %840 = vmatprep.mubr.bf16.mxu0 0
    %841 = vmatmul.mubr.bf16.gmra.mrb[0].mxu0 %v683
    %v842 = vpop.f32.mrb[0].mxu0
    %v843 = vadd.f32 %v802, %v842
    %v844 = vpop.f32.mrb[0].mxu0
    %v845 = vadd.f32 %v804, %v844
    %v846 = vpop.f32.mrb[0].mxu0
    %v847 = vpop.f32.mrb[0].mxu0
    %848 = vdwg.mxu0
    %v849 = vmax.f32 %v843, 0.0
    %v850 = vmax.f32 %v845, 0.0
    %v851 = vpack.c.bf16 %v849, %v849
    %v852 = vpack.c.bf16 %v850, %v850
    %v853 = vld [vmem:[#allocation7] sm:$0xf]
    %v854 = vld [vmem:[#allocation7 + $0x4] sm:$0xf]
    %v855 = vld [vmem:[#allocation7 + $0x8] sm:$0xf]
    %v856 = vld [vmem:[#allocation7 + $0xc] sm:$0xf]
    %v857 = vld [vmem:[#allocation7 + $0x10] sm:$0xf]
    %v858 = vld [vmem:[#allocation7 + $0x14] sm:$0xf]
    %v859 = vld [vmem:[#allocation7 + $0x18] sm:$0xf]
    %v860 = vld [vmem:[#allocation7 + $0x1c] sm:$0xf]
    %v861 = vld [vmem:[#allocation7 + $0x20] sm:$0xf]
    %v862 = vld [vmem:[#allocation7 + $0x24] sm:$0xf]
    %v863 = vld [vmem:[#allocation7 + $0x28] sm:$0xf]
    %v864 = vld [vmem:[#allocation7 + $0x2c] sm:$0xf]
    %v865 = vld [vmem:[#allocation7 + $0x30] sm:$0xf]
    %v866 = vld [vmem:[#allocation7 + $0x34] sm:$0xf]
    %v867 = vld [vmem:[#allocation7 + $0x38] sm:$0xf]
    %v868 = vld [vmem:[#allocation7 + $0x3c] sm:$0xf]
    %v869 = vld [vmem:[#allocation7 + $0x40] sm:$0xf]
    %v870 = vld [vmem:[#allocation7 + $0x44] sm:$0xf]
    %v871 = vld [vmem:[#allocation7 + $0x48] sm:$0xf]
    %v872 = vld [vmem:[#allocation7 + $0x4c] sm:$0xf]
    %v873 = vld [vmem:[#allocation7 + $0x50] sm:$0xf]
    %v874 = vld [vmem:[#allocation7 + $0x54] sm:$0xf]
    %v875 = vld [vmem:[#allocation7 + $0x58] sm:$0xf]
    %v876 = vld [vmem:[#allocation7 + $0x5c] sm:$0xf]
    %v877 = vld [vmem:[#allocation7 + $0x60] sm:$0xf]
    %v878 = vld [vmem:[#allocation7 + $0x64] sm:$0xf]
    %v879 = vld [vmem:[#allocation7 + $0x68] sm:$0xf]
    %v880 = vld [vmem:[#allocation7 + $0x6c] sm:$0xf]
    %v881 = vld [vmem:[#allocation7 + $0x70] sm:$0xf]
    %v882 = vld [vmem:[#allocation7 + $0x74] sm:$0xf]
    %v883 = vld [vmem:[#allocation7 + $0x78] sm:$0xf]
    %v884 = vld [vmem:[#allocation7 + $0x7c] sm:$0xf]
    %v885 = vld [vmem:[%s4] sm:$0x1]
    %v887 = vlaneseq
    %v888 = vshrl.u32 %v887, 7
    %v889 = vsub.s32 0, %v888
    %v890 = vrot.slane %v885, %v889
    %v924 = vunpack.c.l.b16 %v853
    %v925 = vunpack.c.l.b16 %v854
    %v926 = vunpack.c.l.b16 %v855
    %v927 = vunpack.c.l.b16 %v856
    %v928 = vunpack.c.l.b16 %v857
    %v929 = vunpack.c.l.b16 %v858
    %v930 = vunpack.c.l.b16 %v859
    %v931 = vunpack.c.l.b16 %v860
    %v932 = vunpack.c.l.b16 %v861
    %v933 = vunpack.c.l.b16 %v862
    %v934 = vunpack.c.l.b16 %v863
    %v935 = vunpack.c.l.b16 %v864
    %v936 = vunpack.c.l.b16 %v865
    %v937 = vunpack.c.l.b16 %v866
    %v938 = vunpack.c.l.b16 %v867
    %v939 = vunpack.c.l.b16 %v868
    %v940 = vunpack.c.l.b16 %v869
    %v941 = vunpack.c.l.b16 %v870
    %v942 = vunpack.c.l.b16 %v871
    %v943 = vunpack.c.l.b16 %v872
    %v944 = vunpack.c.l.b16 %v873
    %v945 = vunpack.c.l.b16 %v874
    %v946 = vunpack.c.l.b16 %v875
    %v947 = vunpack.c.l.b16 %v876
    %v948 = vunpack.c.l.b16 %v877
    %v949 = vunpack.c.l.b16 %v878
    %v950 = vunpack.c.l.b16 %v879
    %v951 = vunpack.c.l.b16 %v880
    %v952 = vunpack.c.l.b16 %v881
    %v953 = vunpack.c.l.b16 %v882
    %v954 = vunpack.c.l.b16 %v883
    %v955 = vunpack.c.l.b16 %v884
    %v956 = vpack.c.b16 %v925, %v924
    %v957 = vpack.c.b16 %v927, %v926
    %v958 = vpack.c.b16 %v929, %v928
    %v959 = vpack.c.b16 %v931, %v930
    %v960 = vpack.c.b16 %v933, %v932
    %v961 = vpack.c.b16 %v935, %v934
    %v962 = vpack.c.b16 %v937, %v936
    %v963 = vpack.c.b16 %v939, %v938
    %v964 = vpack.c.b16 %v941, %v940
    %v965 = vpack.c.b16 %v943, %v942
    %v966 = vpack.c.b16 %v945, %v944
    %v967 = vpack.c.b16 %v947, %v946
    %v968 = vpack.c.b16 %v949, %v948
    %v969 = vpack.c.b16 %v951, %v950
    %v970 = vpack.c.b16 %v953, %v952
    %v971 = vpack.c.b16 %v955, %v954
    %988 = vmatprep.subr.bf16.mxu0 0
    %989 = vmatpush1.bf16.msra.mxu0 %v956
    %990 = vmatprep.subr.bf16.mxu0 0
    %991 = vmatpush1.bf16.msra.mxu0 %v957
    %992 = vmatprep.subr.bf16.mxu0 0
    %993 = vmatpush1.bf16.msra.mxu0 %v958
    %994 = vmatprep.subr.bf16.mxu0 0
    %995 = vmatpush1.bf16.msra.mxu0 %v959
    %996 = vmatprep.subr.bf16.mxu0 0
    %997 = vmatpush1.bf16.msra.mxu0 %v960
    %998 = vmatprep.subr.bf16.mxu0 0
    %999 = vmatpush1.bf16.msra.mxu0 %v961
    %1000 = vmatprep.subr.bf16.mxu0 0
    %1001 = vmatpush1.bf16.msra.mxu0 %v962
    %1002 = vmatprep.subr.bf16.mxu0 0
    %1003 = vmatpush1.bf16.msra.mxu0 %v963
    %1004 = vmatprep.subr.bf16.mxu0 0
    %1005 = vmatpush1.bf16.msra.mxu0 %v964
    %1006 = vmatprep.subr.bf16.mxu0 0
    %1007 = vmatpush1.bf16.msra.mxu0 %v965
    %1008 = vmatprep.subr.bf16.mxu0 0
    %1009 = vmatpush1.bf16.msra.mxu0 %v966
    %1010 = vmatprep.subr.bf16.mxu0 0
    %1011 = vmatpush1.bf16.msra.mxu0 %v967
    %1012 = vmatprep.subr.bf16.mxu0 0
    %1013 = vmatpush1.bf16.msra.mxu0 %v968
    %1014 = vmatprep.subr.bf16.mxu0 0
    %1015 = vmatpush1.bf16.msra.mxu0 %v969
    %1016 = vmatprep.subr.bf16.mxu0 0
    %1017 = vmatpush1.bf16.msra.mxu0 %v970
    %1018 = vmatprep.subr.bf16.mxu0 0
    %1019 = vmatpush1.bf16.msra.mxu0 %v971
    %1020 = vmatprep.mubr.bf16.mxu0 %v852
    %1021 = vmatmul.mubr.bf16.gmra.mrb[0].mxu0 %v851
    %v1022 = vpop.f32.mrb[0].mxu0
    %v1023 = vadd.f32 %v890, %v1022
    %v1024 = vpop.f32.mrb[0].mxu0
    %v1025 = vpop.f32.mrb[0].mxu0
    %v1026 = vpop.f32.mrb[0].mxu0
    %1027 = vdwg.mxu0
    %v1028 = vpack.c.bf16 %v1023, %v1023
    %1029 = vst [vmem:[#allocation8] sm:$0x3] %v1028
    // Predicated region
    $region34: #{tpu_custom_call.1} parent=1 // pred_check
      _
    $region35: #{tpu_custom_call.1} parent=1 // pred_check_branch
      %1031 = sbr.rel (0) target = $region37
    $region36: #{tpu_custom_call.1} parent=1 // pred_region
      %s1033 = ssub.s32 32, 32
      %1034 = vsyncadd [#allocation4], %s1033
      %s1036 = sshll.u32 [#allocation8], 4
      %s1037 = int_to_ptr.vmem [resolvable:$true] %s1036
      %1039 = dma.vmem_to_hbm [thread:$0]  %s1037, 32, %s5, [#allocation4]
    $region37: #{tpu_custom_call.1} parent=1 // pred_fallthru
      _
    // Predicated region
    $region38: #{tpu_custom_call.1} parent=1 // pred_check
      _
    $region39: #{tpu_custom_call.1} parent=1 // pred_check_branch
      %1041 = sbr.rel (0) target = $region41
    $region40: #{tpu_custom_call.1} parent=1 // pred_region
      %1042 = dma.done [#allocation4], 32
    $region41: #{tpu_custom_call.1} parent=1 // pred_fallthru
      _
    %1043 = vsyncpa [#allocation3], 1
    %1044 = vsyncpa [#allocation6], 1
    %1045 = vsyncpa [#allocation4], 1

</llo_original>
